<compile_context>
chip_gen: v5e
topology: v5e:2x2
jax: 0.10.0
libtpu: 0.0.40
codegen_flags: <defaults>
</compile_context>

<pallas_src>
import functools
import math

import jax
import jax.numpy as jnp
from jax.experimental import pallas as pl
from jax.experimental.pallas import tpu as pltpu

LN_EPS = 1e-5
VMEM_LIMIT = 32 * 1024 * 1024


def _pick_tile(dim, target, align):
    """Largest align-multiple divisor of `dim` that is <= target (falls back to dim)."""
    if dim <= target:
        return dim
    t = (target // align) * align
    while t >= align:
        if dim % t == 0:
            return t
        t -= align
    return dim


def _ln(y, gamma, beta, eps):
    mu = jnp.mean(y, axis=-1, keepdims=True)
    yc = y - mu
    var = jnp.mean(yc * yc, axis=-1, keepdims=True)
    return yc * jax.lax.rsqrt(var + eps) * gamma + beta


def _mm_epilogue(y, b, activation):
    y = y + b
    if activation == "gelu":
        # TODO(synk): HF RoBERTa uses erf-GELU; tanh-approx kept for guaranteed Mosaic lowering.
        y = jax.nn.gelu(y, approximate=True)
    elif activation == "tanh":
        y = jnp.tanh(y)
    return y


# --------------------- tiled matmul + bias (+ activation) ---------------------

def _mm_kernel_noacc(x_ref, w_ref, b_ref, o_ref, *, activation):
    y = jnp.dot(x_ref[...], w_ref[...], preferred_element_type=jnp.float32)
    o_ref[...] = _mm_epilogue(y, b_ref[...], activation).astype(o_ref.dtype)


def _mm_kernel_acc(x_ref, w_ref, b_ref, o_ref, acc_ref, *, activation):
    k = pl.program_id(2)

    @pl.when(k == 0)
    def _():
        acc_ref[...] = jnp.zeros_like(acc_ref)

    acc_ref[...] += jnp.dot(x_ref[...], w_ref[...],
                            preferred_element_type=jnp.float32)

    @pl.when(k == pl.num_programs(2) - 1)
    def _():
        o_ref[...] = _mm_epilogue(acc_ref[...], b_ref[...], activation).astype(o_ref.dtype)


def matmul_bias(x, w, b, activation="none", out_dtype=jnp.bfloat16,
                tm_target=512, tn_target=1024, tk_target=1024):
    """y = act(x @ w + b); x:[M,K] bf16, w:[K,N] bf16, b:[1,N] f32 -> [M,N]."""
    M, K = x.shape
    N = w.shape[1]
    tm = _pick_tile(M, tm_target, 8)
    tn = _pick_tile(N, tn_target, 128)
    tk = _pick_tile(K, tk_target, 128)
    out_bytes = jnp.dtype(out_dtype).itemsize
    cost = pl.CostEstimate(
        flops=2 * M * N * K,
        transcendentals=(M * N if activation in ("gelu", "tanh") else 0),
        bytes_accessed=M * K * 2 + K * N * 2 + M * N * out_bytes + N * 4)

    if tk == K:
        # Whole contraction in one block: no reduction grid axis, no acc scratch.
        # (On v7x keep an eye on the (M/tm)*(N/tn) parallel grid staying >= 2.)
        return pl.pallas_call(
            functools.partial(_mm_kernel_noacc, activation=activation),
            out_shape=jax.ShapeDtypeStruct((M, N), out_dtype),
            grid_spec=pltpu.PrefetchScalarGridSpec(
                num_scalar_prefetch=0,
                grid=(M // tm, N // tn),
                in_specs=[pl.BlockSpec((tm, K), lambda i, j: (i, 0)),
                          pl.BlockSpec((K, tn), lambda i, j: (0, j)),
                          pl.BlockSpec((1, tn), lambda i, j: (0, j))],
                out_specs=pl.BlockSpec((tm, tn), lambda i, j: (i, j))),
            compiler_params=pltpu.CompilerParams(
                dimension_semantics=("parallel", "parallel"),
                vmem_limit_bytes=VMEM_LIMIT),
            cost_estimate=cost,
        )(x, w, b.reshape(1, N))

    return pl.pallas_call(
        functools.partial(_mm_kernel_acc, activation=activation),
        out_shape=jax.ShapeDtypeStruct((M, N), out_dtype),
        grid_spec=pltpu.PrefetchScalarGridSpec(
            num_scalar_prefetch=0,
            grid=(M // tm, N // tn, K // tk),
            in_specs=[pl.BlockSpec((tm, tk), lambda i, j, k: (i, k)),
                      pl.BlockSpec((tk, tn), lambda i, j, k: (k, j)),
                      pl.BlockSpec((1, tn), lambda i, j, k: (0, j))],
            out_specs=pl.BlockSpec((tm, tn), lambda i, j, k: (i, j)),
            scratch_shapes=[pltpu.VMEM((tm, tn), jnp.float32)]),
        compiler_params=pltpu.CompilerParams(
            dimension_semantics=("parallel", "parallel", "arbitrary"),
            vmem_limit_bytes=VMEM_LIMIT),
        cost_estimate=cost,
    )(x, w, b.reshape(1, N))


# --------- tiled matmul + bias + residual add + LayerNorm (fused epilogue) ---------

def _mm_res_ln_kernel_noacc(x_ref, w_ref, b_ref, res_ref, g_ref, beta_ref, o_ref, *, eps):
    y = jnp.dot(x_ref[...], w_ref[...], preferred_element_type=jnp.float32)
    y = y + b_ref[...] + res_ref[...].astype(jnp.float32)
    o_ref[...] = _ln(y, g_ref[...], beta_ref[...], eps).astype(o_ref.dtype)


def _mm_res_ln_kernel_acc(x_ref, w_ref, b_ref, res_ref, g_ref, beta_ref,
                          o_ref, acc_ref, *, eps):
    k = pl.program_id(1)

    @pl.when(k == 0)
    def _():
        acc_ref[...] = jnp.zeros_like(acc_ref)

    acc_ref[...] += jnp.dot(x_ref[...], w_ref[...],
                            preferred_element_type=jnp.float32)

    @pl.when(k == pl.num_programs(1) - 1)
    def _():
        y = acc_ref[...] + b_ref[...] + res_ref[...].astype(jnp.float32)
        o_ref[...] = _ln(y, g_ref[...], beta_ref[...], eps).astype(o_ref.dtype)


def matmul_bias_residual_ln(x, w, b, residual, gamma, beta, eps=LN_EPS,
                            tm_target=512, tk_target=1024):
    """LayerNorm(x @ w + b + residual); the hidden (N) axis stays untiled for the LN."""
    M, K = x.shape
    N = w.shape[1]
    tm = _pick_tile(M, tm_target, 8)
    tk = _pick_tile(K, tk_target, 128)
    cost = pl.CostEstimate(
        flops=2 * M * N * K,
        transcendentals=M,
        bytes_accessed=M * K * 2 + K * N * 2 + 2 * M * N * 2 + 3 * N * 4)

    if tk == K:
        return pl.pallas_call(
            functools.partial(_mm_res_ln_kernel_noacc, eps=eps),
            out_shape=jax.ShapeDtypeStruct((M, N), jnp.bfloat16),
            grid_spec=pltpu.PrefetchScalarGridSpec(
                num_scalar_prefetch=0,
                grid=(M // tm,),
                in_specs=[pl.BlockSpec((tm, K), lambda i: (i, 0)),
                          pl.BlockSpec((K, N), lambda i: (0, 0)),
                          pl.BlockSpec((1, N), lambda i: (0, 0)),
                          pl.BlockSpec((tm, N), lambda i: (i, 0)),
                          pl.BlockSpec((1, N), lambda i: (0, 0)),
                          pl.BlockSpec((1, N), lambda i: (0, 0))],
                out_specs=pl.BlockSpec((tm, N), lambda i: (i, 0))),
            compiler_params=pltpu.CompilerParams(
                dimension_semantics=("parallel",),
                vmem_limit_bytes=VMEM_LIMIT),
            cost_estimate=cost,
        )(x, w, b, residual, gamma, beta)

    return pl.pallas_call(
        functools.partial(_mm_res_ln_kernel_acc, eps=eps),
        out_shape=jax.ShapeDtypeStruct((M, N), jnp.bfloat16),
        grid_spec=pltpu.PrefetchScalarGridSpec(
            num_scalar_prefetch=0,
            grid=(M // tm, K // tk),
            in_specs=[pl.BlockSpec((tm, tk), lambda i, k: (i, k)),
                      pl.BlockSpec((tk, N), lambda i, k: (k, 0)),
                      pl.BlockSpec((1, N), lambda i, k: (0, 0)),
                      pl.BlockSpec((tm, N), lambda i, k: (i, 0)),
                      pl.BlockSpec((1, N), lambda i, k: (0, 0)),
                      pl.BlockSpec((1, N), lambda i, k: (0, 0))],
            out_specs=pl.BlockSpec((tm, N), lambda i, k: (i, 0)),
            scratch_shapes=[pltpu.VMEM((tm, N), jnp.float32)]),
        compiler_params=pltpu.CompilerParams(
            dimension_semantics=("parallel", "arbitrary"),
            vmem_limit_bytes=VMEM_LIMIT),
        cost_estimate=cost,
    )(x, w, b, residual, gamma, beta)


# ---------- fully fused FFN: dense -> GELU -> dense -> residual -> LayerNorm ----------

def _ffn_fused_kernel(x_ref, w1_ref, b1_ref, w2_ref, b2_ref, g_ref, beta_ref,
                      o_ref, acc_ref, *, eps):
    k = pl.program_id(1)

    @pl.when(k == 0)
    def _():
        acc_ref[...] = jnp.zeros_like(acc_ref)

    x = x_ref[...]
    h1 = jnp.dot(x, w1_ref[...], preferred_element_type=jnp.float32) + b1_ref[...]
    # TODO(synk): HF RoBERTa uses erf-GELU; tanh-approx kept for guaranteed Mosaic lowering.
    h1 = jax.nn.gelu(h1, approximate=True)
    acc_ref[...] += jnp.dot(h1.astype(x.dtype), w2_ref[...],
                            preferred_element_type=jnp.float32)

    @pl.when(k == pl.num_programs(1) - 1)
    def _():
        # Residual is the FFN input itself (x block is resident across the inter axis).
        y = acc_ref[...] + b2_ref[...] + x_ref[...].astype(jnp.float32)
        o_ref[...] = _ln(y, g_ref[...], beta_ref[...], eps).astype(o_ref.dtype)


def ffn_fused(x, w1, b1, w2, b2, gamma, beta, eps=LN_EPS,
              tm_target=512, tki_target=1024):
    """LayerNorm(gelu(x@W1+b1)@W2 + b2 + x); the [M, inter] activation never hits HBM."""
    M, H = x.shape
    inter = w1.shape[1]
    tm = _pick_tile(M, tm_target, 8)
    tki = _pick_tile(inter, tki_target, 128)
    cost = pl.CostEstimate(
        flops=4 * M * H * inter,
        transcendentals=M * inter + M,
        bytes_accessed=2 * M * H * 2 + 2 * H * inter * 2 + (inter + 3 * H + H) * 4)
    return pl.pallas_call(
        functools.partial(_ffn_fused_kernel, eps=eps),
        out_shape=jax.ShapeDtypeStruct((M, H), jnp.bfloat16),
        grid_spec=pltpu.PrefetchScalarGridSpec(
            num_scalar_prefetch=0,
            grid=(M // tm, inter // tki),
            in_specs=[pl.BlockSpec((tm, H), lambda i, k: (i, 0)),
                      pl.BlockSpec((H, tki), lambda i, k: (0, k)),
                      pl.BlockSpec((1, tki), lambda i, k: (0, k)),
                      pl.BlockSpec((tki, H), lambda i, k: (k, 0)),
                      pl.BlockSpec((1, H), lambda i, k: (0, 0)),
                      pl.BlockSpec((1, H), lambda i, k: (0, 0)),
                      pl.BlockSpec((1, H), lambda i, k: (0, 0))],
            out_specs=pl.BlockSpec((tm, H), lambda i, k: (i, 0)),
            scratch_shapes=[pltpu.VMEM((tm, H), jnp.float32)]),
        compiler_params=pltpu.CompilerParams(
            dimension_semantics=("parallel", "arbitrary"),
            vmem_limit_bytes=VMEM_LIMIT),
        cost_estimate=cost,
    )(x, w1, b1, w2, b2, gamma, beta)


# ------------------------- LayerNorm (embeddings, no residual) -------------------------

def _ln_kernel(x_ref, g_ref, b_ref, o_ref, *, eps):
    x = x_ref[...].astype(jnp.float32)
    o_ref[...] = _ln(x, g_ref[...], b_ref[...], eps).astype(o_ref.dtype)


def layernorm(x, gamma, beta, eps=LN_EPS, tm_target=512):
    M, N = x.shape
    tm = _pick_tile(M, tm_target, 8)
    return pl.pallas_call(
        functools.partial(_ln_kernel, eps=eps),
        out_shape=jax.ShapeDtypeStruct((M, N), jnp.bfloat16),
        grid_spec=pltpu.PrefetchScalarGridSpec(
            num_scalar_prefetch=0,
            grid=(M // tm,),
            in_specs=[pl.BlockSpec((tm, N), lambda i: (i, 0)),
                      pl.BlockSpec((1, N), lambda i: (0, 0)),
                      pl.BlockSpec((1, N), lambda i: (0, 0))],
            out_specs=pl.BlockSpec((tm, N), lambda i: (i, 0))),
        compiler_params=pltpu.CompilerParams(dimension_semantics=("parallel",)),
    )(x, gamma, beta)


# -------------------------- attention (flash-style over KV tiles) --------------------------

def _heads_per_block(n_heads, head_dim):
    for hpb in range(1, n_heads + 1):
        if n_heads % hpb == 0 and (hpb * head_dim) % 128 == 0:
            return hpb
    return n_heads


def _flash_attn_kernel(q_ref, k_ref, v_ref, bias_ref, o_ref,
                       m_ref, l_ref, acc_ref, *, scale, hpb, head_dim):
    kv = pl.program_id(2)

    @pl.when(kv == 0)
    def _():
        m_ref[...] = jnp.full_like(m_ref, -jnp.inf)
        l_ref[...] = jnp.zeros_like(l_ref)
        acc_ref[...] = jnp.zeros_like(acc_ref)

    bias = bias_ref[0]                                   # (1, tkv) additive padding mask, fp32
    # Fold 1/sqrt(D) into q once per block (SxD-ish multiply instead of SxS per head).
    q_all = (q_ref[...].astype(jnp.float32) * scale).astype(q_ref.dtype)
    k_all = k_ref[...]
    v_all = v_ref[...]

    for h in range(hpb):                                 # per-head results written eagerly
        sl = slice(h * head_dim, (h + 1) * head_dim)     # into VMEM scratch (no concat)
        s = jax.lax.dot_general(q_all[:, sl], k_all[:, sl],
                                (((1,), (1,)), ((), ())),
                                preferred_element_type=jnp.float32)   # (S, tkv)
        s = s + bias
        m_prev = m_ref[:, h:h + 1]
        m_new = jnp.maximum(m_prev, jnp.max(s, axis=-1, keepdims=True))
        alpha = jnp.exp(m_prev - m_new)
        p = jnp.exp(s - m_new)                                        # unnormalized probs
        l_ref[:, h:h + 1] = alpha * l_ref[:, h:h + 1] + jnp.sum(p, axis=-1, keepdims=True)
        m_ref[:, h:h + 1] = m_new
        pv = jax.lax.dot_general(p.astype(v_all.dtype), v_all[:, sl],
                                 (((1,), (0,)), ((), ())),
                                 preferred_element_type=jnp.float32)  # (S, D)
        acc_ref[:, sl] = alpha * acc_ref[:, sl] + pv

    @pl.when(kv == pl.num_programs(2) - 1)
    def _():
        # Deferred softmax normalization: one SxD fp32 multiply per head.
        for h in range(hpb):
            sl = slice(h * head_dim, (h + 1) * head_dim)
            acc_ref[:, sl] = acc_ref[:, sl] * pl.reciprocal(l_ref[:, h:h + 1], approx=True)
        o_ref[...] = acc_ref[...].astype(o_ref.dtype)    # single lane-dense (S, hpb*D) store


def attention(qkv, attn_bias, *, batch, seq_len, n_heads, head_dim, hidden,
              tkv_target=512):
    """qkv: [B*S, 3H] bf16 (fused Q|K|V), attn_bias: [B,1,S] f32 -> context [B*S, H] bf16."""
    B, S, H, D = batch, seq_len, hidden, head_dim
    hpb = _heads_per_block(n_heads, D)
    G = n_heads // hpb
    bw = hpb * D
    assert S % 8 == 0, "sequence length must be a multiple of 8 (sublane tiling)"
    assert bw % 128 == 0, "heads_per_block * head_dim must be lane-aligned (128)"
    tkv = _pick_tile(S, tkv_target, 128)
    nkv = S // tkv
    scale = 1.0 / math.sqrt(D)

    q_spec = pl.BlockSpec((S, bw), lambda b, g, kv: (b, g))
    k_spec = pl.BlockSpec((tkv, bw), lambda b, g, kv: (b * nkv + kv, G + g))
    v_spec = pl.BlockSpec((tkv, bw), lambda b, g, kv: (b * nkv + kv, 2 * G + g))
    m_spec = pl.BlockSpec((1, 1, tkv), lambda b, g, kv: (b, 0, kv))
    o_spec = pl.BlockSpec((S, bw), lambda b, g, kv: (b, g))

    cost = pl.CostEstimate(
        flops=4 * B * n_heads * S * S * D,
        transcendentals=B * n_heads * S * S,
        bytes_accessed=3 * B * S * H * 2 + B * S * H * 2 + B * S * 4)

    return pl.pallas_call(
        functools.partial(_flash_attn_kernel, scale=scale, hpb=hpb, head_dim=D),
        out_shape=jax.ShapeDtypeStruct((B * S, H), jnp.bfloat16),
        grid_spec=pltpu.PrefetchScalarGridSpec(
            num_scalar_prefetch=0,
            grid=(B, G, nkv),
            in_specs=[q_spec, k_spec, v_spec, m_spec],
            out_specs=o_spec,
            scratch_shapes=[pltpu.VMEM((S, hpb), jnp.float32),   # running max  m
                            pltpu.VMEM((S, hpb), jnp.float32),   # running sum  l
                            pltpu.VMEM((S, bw), jnp.float32)]),  # output accumulator
        compiler_params=pltpu.CompilerParams(
            dimension_semantics=("parallel", "parallel", "arbitrary"),
            vmem_limit_bytes=VMEM_LIMIT),
        cost_estimate=cost,
    )(qkv, qkv, qkv, attn_bias)


# ------------------------------------ model glue ------------------------------------

def init_params(key, vocab, max_pos, hidden, n_layers, n_heads, inter):
    keys = iter(jax.random.split(key, 4 + 4 * n_layers))

    def dense(k, din, dout):
        w = (0.02 * jax.random.normal(k, (din, dout), jnp.float32)).astype(jnp.bfloat16)
        b = jnp.zeros((1, dout), jnp.float32)
        return w, b

    def ln():
        return (jnp.ones((1, hidden), jnp.float32),
                jnp.zeros((1, hidden), jnp.float32))

    params = {
        "word_emb": 0.02 * jax.random.normal(next(keys), (vocab, hidden), jnp.float32),
        "pos_emb": 0.02 * jax.random.normal(next(keys), (max_pos, hidden), jnp.float32),
        "type_emb": 0.02 * jax.random.normal(next(keys), (1, hidden), jnp.float32),
        "emb_ln": ln(),
        "layers": [],
        "head_dense": dense(next(keys), hidden, hidden),
    }
    for _ in range(n_layers):
        params["layers"].append({
            # fused [H, 3H] == concat(Wq, Wk, Wv) of the separate HF projections
            "qkv": dense(next(keys), hidden, 3 * hidden),
            "o": dense(next(keys), hidden, hidden),
            "attn_ln": ln(),
            "ffn_in": dense(next(keys), hidden, inter),
            "ffn_out": dense(next(keys), inter, hidden),
            "ffn_ln": ln(),
        })
    return params


def stroberta_forward(params, input_ids, n_heads):
    B, S = input_ids.shape
    H = params["word_emb"].shape[1]
    D = H // n_heads
    pad_id = 1

    # RoBERTa padding-aware position ids (create_position_ids_from_input_ids).
    mask = (input_ids != pad_id).astype(jnp.int32)                       # [B, S]
    positions = jnp.cumsum(mask, axis=1) * mask + pad_id                 # [B, S]

    # TODO(synk): HF tokenization of raw text pairs has no Pallas equivalent; the kernel
    # consumes pre-tokenized int32 ids, and the embedding gathers stay in XLA.
    emb = (params["word_emb"][input_ids]
           + params["pos_emb"][positions]
           + params["type_emb"][0][None, None, :])                       # [B, S, H] f32
    h = layernorm(emb.reshape(B * S, H).astype(jnp.bfloat16),
                  *params["emb_ln"])                                     # bf16 [B*S, H]

    # Additive attention bias: 0 for real tokens, -1e9 for padding keys.
    attn_bias = ((mask.astype(jnp.float32) - 1.0) * 1e9).reshape(B, 1, S)

    for layer in params["layers"]:
        qkv = matmul_bias(h, *layer["qkv"])                              # [B*S, 3H] bf16
        ctx = attention(qkv, attn_bias, batch=B, seq_len=S,
                        n_heads=n_heads, head_dim=D, hidden=H)           # [B*S, H]  bf16
        h = matmul_bias_residual_ln(ctx, *layer["o"], h, *layer["attn_ln"])
        h = ffn_fused(h, *layer["ffn_in"], *layer["ffn_out"], *layer["ffn_ln"])

    # RobertaClassificationHead with out_proj = Identity (dropout no-op in eval mode):
    #   x = hidden[:, 0, :]; x = tanh(dense(x)); return x
    cls = h.reshape(B, S, H)[:, 0, :]                                    # [B, H] bf16
    return matmul_bias(cls, *params["head_dense"], activation="tanh",
                       out_dtype=jnp.float32)


# -------------------------------------- driver --------------------------------------

if __name__ == "__main__":
    B, S, H = 2, 8, 128
    N_HEADS, N_LAYERS, INTER, VOCAB = 2, 2, 256, 100

    key = jax.random.PRNGKey(0)
    pkey, ikey = jax.random.split(key)
    params = init_params(pkey, VOCAB, S + 2, H, N_LAYERS, N_HEADS, INTER)

    input_ids = jax.random.randint(ikey, (B, S), 2, VOCAB, dtype=jnp.int32)
    input_ids = input_ids.at[1, S - 1].set(1)   # one padding token to exercise the mask path

    emb = stroberta_forward(params, input_ids, N_HEADS)
    emb = jax.block_until_ready(emb)
    assert emb.shape == (B, H) and emb.dtype == jnp.float32
    print("KERNEL_OK")
</pallas_src>

<mosaic_0001>
module attributes {stable_mosaic.version = 11 : i64} {
  func.func @_ln_kernel(%arg0: i32, %arg1: memref<16x128xbf16, #tpu.memory_space<vmem>>, %arg2: memref<1x128xf32, #tpu.memory_space<vmem>>, %arg3: memref<1x128xf32, #tpu.memory_space<vmem>>, %arg4: memref<16x128xbf16, #tpu.memory_space<vmem>>) attributes {dimension_semantics = [#tpu.dimension_semantics<parallel>], iteration_bounds = array<i64: 1>, scalar_prefetch = 0 : i64, scratch_operands = 0 : i64, tpu.core_type = #tpu.core_type<tc>, window_params = [{transform_indices = @transform_0, window_bounds = array<i64: 16, 128>}, {pipeline_mode = #tpu.pipeline_mode<synchronous>, transform_indices = @transform_1, window_bounds = array<i64: 1, 128>}, {pipeline_mode = #tpu.pipeline_mode<synchronous>, transform_indices = @transform_2, window_bounds = array<i64: 1, 128>}, {transform_indices = @transform_3, window_bounds = array<i64: 16, 128>}]} {
    %c0 = arith.constant 0 : index
    %c0_0 = arith.constant 0 : index
    %0 = vector.load %arg1[%c0, %c0_0] : memref<16x128xbf16, #tpu.memory_space<vmem>>, vector<16x128xbf16>
    %1 = arith.extf %0 : vector<16x128xbf16> to vector<16x128xf32>
    %c0_1 = arith.constant 0 : index
    %c0_2 = arith.constant 0 : index
    %2 = vector.load %arg2[%c0_1, %c0_2] : memref<1x128xf32, #tpu.memory_space<vmem>>, vector<1x128xf32>
    %c0_3 = arith.constant 0 : index
    %c0_4 = arith.constant 0 : index
    %3 = vector.load %arg3[%c0_3, %c0_4] : memref<1x128xf32, #tpu.memory_space<vmem>>, vector<1x128xf32>
    %cst = arith.constant dense<0.000000e+00> : vector<16xf32>
    %4 = vector.multi_reduction <add>, %1, %cst [1] : vector<16x128xf32> to vector<16xf32>
    %5 = vector.shape_cast %4 : vector<16xf32> to vector<16x1xf32>
    %cst_5 = arith.constant 1.280000e+02 : f32
    %6 = vector.broadcast %cst_5 : f32 to vector<16x1xf32>
    %7 = arith.divf %5, %6 : vector<16x1xf32>
    %8 = vector.broadcast %7 : vector<16x1xf32> to vector<16x128xf32>
    %9 = arith.subf %1, %8 : vector<16x128xf32>
    %10 = arith.mulf %9, %9 : vector<16x128xf32>
    %cst_6 = arith.constant dense<0.000000e+00> : vector<16xf32>
    %11 = vector.multi_reduction <add>, %10, %cst_6 [1] : vector<16x128xf32> to vector<16xf32>
    %12 = vector.shape_cast %11 : vector<16xf32> to vector<16x1xf32>
    %cst_7 = arith.constant 1.280000e+02 : f32
    %13 = vector.broadcast %cst_7 : f32 to vector<16x1xf32>
    %14 = arith.divf %12, %13 : vector<16x1xf32>
    %cst_8 = arith.constant 9.99999974E-6 : f32
    %15 = vector.broadcast %cst_8 : f32 to vector<16x1xf32>
    %16 = arith.addf %14, %15 : vector<16x1xf32>
    %17 = math.rsqrt %16 : vector<16x1xf32>
    %18 = vector.broadcast %17 : vector<16x1xf32> to vector<16x128xf32>
    %19 = arith.mulf %9, %18 : vector<16x128xf32>
    %20 = vector.broadcast %2 : vector<1x128xf32> to vector<16x128xf32>
    %21 = arith.mulf %19, %20 : vector<16x128xf32>
    %22 = vector.broadcast %3 : vector<1x128xf32> to vector<16x128xf32>
    %23 = arith.addf %21, %22 : vector<16x128xf32>
    %24 = arith.truncf %23 : vector<16x128xf32> to vector<16x128xbf16>
    %c0_9 = arith.constant 0 : index
    %c0_10 = arith.constant 0 : index
    %25 = vector.load %arg4[%c0_9, %c0_10] : memref<16x128xbf16, #tpu.memory_space<vmem>>, vector<16x128xbf16>
    tpu.vector_store %arg4[%c0_9, %c0_10], %24 {strides = array<i32>} : memref<16x128xbf16, #tpu.memory_space<vmem>>, vector<16x128xbf16>,
    return
  }
  func.func @transform_0(%arg0: i32) -> (i32, i32) {
    %c0_i32 = arith.constant 0 : i32
    %c0_i32_0 = arith.constant 0 : i32
    return %arg0, %c0_i32 : i32, i32
  }
  func.func @transform_1(%arg0: i32) -> (i32, i32) {
    %c0_i32 = arith.constant 0 : i32
    %c0_i32_0 = arith.constant 0 : i32
    %c0_i32_1 = arith.constant 0 : i32
    return %c0_i32, %c0_i32_0 : i32, i32
  }
  func.func @transform_2(%arg0: i32) -> (i32, i32) {
    %c0_i32 = arith.constant 0 : i32
    %c0_i32_0 = arith.constant 0 : i32
    %c0_i32_1 = arith.constant 0 : i32
    return %c0_i32, %c0_i32_0 : i32, i32
  }
  func.func @transform_3(%arg0: i32) -> (i32, i32) {
    %c0_i32 = arith.constant 0 : i32
    %c0_i32_0 = arith.constant 0 : i32
    return %arg0, %c0_i32 : i32, i32
  }
}

</mosaic_0001>

<llo_original>
// kernel: tpu_custom_call.1
$region0: #{tpu_custom_call.1}
  #allocation0 [shape = 'u32[]', space=smem, size = 0x4, offset = 0x4, fixed_abs, tag = 'smem constant byte address 0x4 - core index']
  #allocation1 [shape = 'u32[72,128]{1,0:T(1,128)}', space=vmem, size = 0x9000, scoped, tag = 'internal scratch']
  %s0 = inlined_call_operand.hbm [shape: bf16[16,128], index: 0, kind: input, shape index: {}]
  %s1 = inlined_call_operand.hbm [shape: f32[1,128], index: 1, kind: input, shape index: {}]
  %s2 = inlined_call_operand.vmem [shape: f32[1,128], index: 2, kind: input, shape index: {}]
  %s3 = inlined_call_operand.hbm [shape: bf16[16,128], index: 3, kind: output, shape index: {}]
  %s4 = sld [smem:[#allocation0]]
  $region30: #{tpu_custom_call.1} parent=0
    _
  %s6 = ssub.s32 1, %s4
  %s7 = scalar_select 0, %s6, %s4
  $region1: #{tpu_custom_call.1} parent=0
    #allocation2 [shape = 'u8[4096]{0}', space=vmem, size = 0x1000, scoped, tag = 'input window, operand 0, single buffered']
    #allocation3 [shape = 's32[1]{0}', space=sflag, size = 0x4, scoped, tag = 'scoped memory for tpu_custom_call.1']
    #allocation4 [shape = 's32[1]{0}', space=sflag, size = 0x4, scoped, tag = 'scoped memory for tpu_custom_call.1']
    #allocation5 [shape = 'u8[512]{0}', space=vmem, size = 0x400, scoped, tag = 'input window, operand 1, single buffered']
    #allocation6 [shape = 's32[1]{0}', space=sflag, size = 0x4, scoped, tag = 'scoped memory for tpu_custom_call.1']
    #allocation7 [shape = 'u8[4096]{0}', space=vmem, size = 0x1000, scoped, tag = 'output window, operand 0, single buffered']
    %8 = vsyncpa [#allocation3], 0
    %9 = vsyncpa [#allocation6], 0
    %10 = vsyncpa [#allocation4], 0
    // Predicated region
    $region2: #{tpu_custom_call.1} parent=1 // pred_check
      _
    $region3: #{tpu_custom_call.1} parent=1 // pred_check_branch
      %12 = sbr.rel (0) target = $region5
    $region4: #{tpu_custom_call.1} parent=1 // pred_region
      %14 = vsyncadd [#allocation3], 0
      %s15 = sshll.u32 %s0, 4
      %s16 = int_to_ptr.hbm [resolvable:$true] %s15
      %s17 = sshll.u32 [#allocation2], 4
      %s18 = int_to_ptr.vmem [resolvable:$true] %s17
      %23 = dma.hbm_to_vmem [thread:$0]  %s16, 128, %s18, [#allocation3], 64, 64, 4
    $region5: #{tpu_custom_call.1} parent=1 // pred_fallthru
      _
    // Predicated region
    $region6: #{tpu_custom_call.1} parent=1 // pred_check
      _
    $region7: #{tpu_custom_call.1} parent=1 // pred_check_branch
      %25 = sbr.rel (0) target = $region9
    $region8: #{tpu_custom_call.1} parent=1 // pred_region
      %27 = vsyncadd [#allocation6], 0
      %s29 = sshll.u32 %s1, 4
      %s30 = int_to_ptr.hbm [resolvable:$true] %s29
      %s31 = sshll.u32 [#allocation5], 4
      %s32 = int_to_ptr.vmem [resolvable:$true] %s31
      %34 = dma.hbm_to_vmem [thread:$0]  %s30, 16, %s32, [#allocation6]
    $region9: #{tpu_custom_call.1} parent=1 // pred_fallthru
      _
    // Predicated region
    $region10: #{tpu_custom_call.1} parent=1 // pred_check
      _
    $region11: #{tpu_custom_call.1} parent=1 // pred_check_branch
      %36 = sbr.rel (0) target = $region13
    $region12: #{tpu_custom_call.1} parent=1 // pred_region
      _
    $region13: #{tpu_custom_call.1} parent=1 // pred_fallthru
      _
    // Predicated region
    $region14: #{tpu_custom_call.1} parent=1 // pred_check
      _
    $region15: #{tpu_custom_call.1} parent=1 // pred_check_branch
      %38 = sbr.rel (0) target = $region17
    $region16: #{tpu_custom_call.1} parent=1 // pred_region
      %40 = dma.done [#allocation3], 128
    $region17: #{tpu_custom_call.1} parent=1 // pred_fallthru
      _
    // Predicated region
    $region18: #{tpu_custom_call.1} parent=1 // pred_check
      _
    $region19: #{tpu_custom_call.1} parent=1 // pred_check_branch
      %42 = sbr.rel (0) target = $region21
    $region20: #{tpu_custom_call.1} parent=1 // pred_region
      %44 = dma.done [#allocation6], 16
    $region21: #{tpu_custom_call.1} parent=1 // pred_fallthru
      _
    %v45 = vld [vmem:[#allocation2] sm:$0xf]
    %v46 = vld [vmem:[#allocation2 + $0x4] sm:$0xf]
    %v47 = vunpack.c.l.bf16 %v45
    %v48 = vunpack.c.l.bf16 %v46
    %v49 = vld [vmem:[#allocation5] sm:$0x1]
    %v50 = vld [vmem:[%s2] sm:$0x1]
    %51 = vadd.xlane.f32.xlu0 %v47
    %v52 = vpop.xlane.xlu0 %51
    %53 = vadd.xlane.f32.xlu0 %v48
    %v54 = vpop.xlane.xlu0 %53
    %v55 = vrcp.pop 128.0
    %v56 = vmul.f32 128.0, %v55
    %v57 = vsub.f32 1.0, %v56
    %v58 = vmul.f32 %v55, %v57
    %v59 = vadd.f32 %v55, %v58
    %vm60 = vweird.f32 %v55
    %v61 = vsel %vm60, %v55, %v59
    %v62 = vmul.f32 %v52, %v61
    %v63 = vmul.f32 %v54, %v61
    %v64 = vsub.f32 %v47, %v62
    %v65 = vsub.f32 %v48, %v63
    %v66 = vmul.f32 %v64, %v64
    %v67 = vmul.f32 %v65, %v65
    %68 = vadd.xlane.f32.xlu0 %v66
    %v69 = vpop.xlane.xlu0 %68
    %70 = vadd.xlane.f32.xlu0 %v67
    %v71 = vpop.xlane.xlu0 %70
    %v72 = vmul.f32 %v69, %v61
    %v73 = vmul.f32 %v71, %v61
    %v74 = vadd.f32 %v72, 1e-05
    %v75 = vadd.f32 %v73, 1e-05
    %v76 = vrsqrt.pop %v74
    %v77 = vmul.f32 %v76, %v74
    %v78 = vmul.f32 %v77, %v76
    %v79 = vmul.f32 0.5, %v78
    %v80 = vsub.f32 1.5, %v79
    %v81 = vmul.f32 %v76, %v80
    %vm82 = vweird.f32 %v74
    %vm83 = vweird.f32 %v76
    %vm84 = vmor %vm82, %vm83
    %v85 = vsel %vm84, %v76, %v81
    %v86 = vrsqrt.pop %v75
    %v87 = vmul.f32 %v86, %v75
    %v88 = vmul.f32 %v87, %v86
    %v89 = vmul.f32 0.5, %v88
    %v90 = vsub.f32 1.5, %v89
    %v91 = vmul.f32 %v86, %v90
    %vm92 = vweird.f32 %v75
    %vm93 = vweird.f32 %v86
    %vm94 = vmor %vm92, %vm93
    %v95 = vsel %vm94, %v86, %v91
    %v96 = vmul.f32 %v64, %v85
    %v97 = vmul.f32 %v65, %v95
    %v99 = vperm.slane %v49, 0
    %v101 = vmul.f32 %v96, %v99
    %v102 = vmul.f32 %v97, %v99
    %v104 = vperm.slane %v50, 0
    %v106 = vadd.f32 %v101, %v104
    %v107 = vadd.f32 %v102, %v104
    %v108 = vpack.c.bf16 %v106, %v106
    %v109 = vpack.c.bf16 %v107, %v107
    %110 = vst [vmem:[#allocation7] sm:$0xf] %v108
    %111 = vst [vmem:[#allocation7 + $0x4] sm:$0xf] %v109
    // Predicated region
    $region22: #{tpu_custom_call.1} parent=1 // pred_check
      _
    $region23: #{tpu_custom_call.1} parent=1 // pred_check_branch
      %113 = sbr.rel (0) target = $region25
    $region24: #{tpu_custom_call.1} parent=1 // pred_region
      %115 = vsyncadd [#allocation4], 0
      %s116 = sshll.u32 [#allocation7], 4
      %s117 = int_to_ptr.vmem [resolvable:$true] %s116
      %s118 = sshll.u32 %s3, 4
      %s119 = int_to_ptr.hbm [resolvable:$true] %s118
      %124 = dma.vmem_to_hbm [thread:$0]  %s117, 128, %s119, [#allocation4], 64, 64, 4
    $region25: #{tpu_custom_call.1} parent=1 // pred_fallthru
      _
    // Predicated region
    $region26: #{tpu_custom_call.1} parent=1 // pred_check
      _
    $region27: #{tpu_custom_call.1} parent=1 // pred_check_branch
      %126 = sbr.rel (0) target = $region29
    $region28: #{tpu_custom_call.1} parent=1 // pred_region
      %128 = dma.done [#allocation4], 128
    $region29: #{tpu_custom_call.1} parent=1 // pred_fallthru
      _
    %129 = vsyncpa [#allocation3], 1
    %130 = vsyncpa [#allocation6], 1
    %131 = vsyncpa [#allocation4], 1

</llo_original>
